<compile_context>
chip_gen: v7x
topology: tpu7x:2x2x1
jax: 0.10.0
libtpu: 0.0.40
codegen_flags: <defaults>
</compile_context>

<pallas_src>
import jax
import jax.numpy as jnp
from jax.experimental import pallas as pl
from jax.experimental.pallas import tpu as pltpu

SMOOTH_DICE = 1.0          # DiceLoss(smooth=1.0)
GAMMA = 2.0                # FocalLoss(gamma=2)  (hard-coded as an explicit square below)
IGNORE_INDEX_CE = 255      # CrossEntropyLoss(ignore_index=255)
MAX_TILE_HW = 8192         # pixels per grid step (lane axis), multiple of 128

# torch.cuda.FloatTensor([1.0405, 0.9311, 1.0038, 1.1441, 1.0039, 0.8766])
CLASS_WEIGHTS = jnp.array([1.0405, 0.9311, 1.0038, 1.1441, 1.0039, 0.8766],
                          dtype=jnp.float32)


def ce_dice_kernel(logits_ref, target_ref, weight_ref,
                   ce_num_ref, ce_den_ref, inter_ref, onehot_ref, focal_ref):
    t = pl.program_id(1)

    # init per-batch-slice accumulators at the first pixel tile
    @pl.when(t == 0)
    def _init():
        ce_num_ref[...] = jnp.zeros_like(ce_num_ref)
        ce_den_ref[...] = jnp.zeros_like(ce_den_ref)
        inter_ref[...] = jnp.zeros_like(inter_ref)
        onehot_ref[...] = jnp.zeros_like(onehot_ref)
        focal_ref[...] = jnp.zeros_like(focal_ref)

    logits = logits_ref[...].astype(jnp.float32)     # (C, T)  classes on sublanes
    target = target_ref[...]                         # (1, T)  int32, pixels on lanes
    weight = weight_ref[...].astype(jnp.float32)     # (C, 1)

    C, T = logits.shape

    # one-hot over the class (sublane) axis; ignore/pad targets (e.g. 255) -> all-zero
    class_ids = jax.lax.broadcasted_iota(jnp.int32, (C, T), 0)
    onehot = (class_ids == target).astype(jnp.float32)              # (C, T)

    # numerically stable log-softmax pieces over the class axis (axis 0, sublanes)
    m = jnp.max(logits, axis=0, keepdims=True)                      # (1, T)
    z = logits - m
    e = jnp.exp(z)
    s = jnp.sum(e, axis=0, keepdims=True)                           # (1, T)
    logs = jnp.log(s)                                               # (1, T)

    z_true = jnp.sum(z * onehot, axis=0, keepdims=True)             # (1, T)
    has_lab = jnp.sum(onehot, axis=0, keepdims=True)                # (1, T) 1 if valid class
    w_pix = jnp.sum(weight * onehot, axis=0, keepdims=True)         # (1, T)

    # per-pixel NLL of the true class; exactly 0 for ignore/pad pixels
    nll = (logs - z_true) * has_lab                                 # (1, T)

    # true-class probability via exp(-nll) (EUP) -- no reciprocal / divide needed
    pt = jnp.exp(-nll)                                              # (1, T)
    one_m_pt = 1.0 - pt
    focal = one_m_pt * one_m_pt * nll                               # gamma == 2

    valid = (target != IGNORE_INDEX_CE).astype(jnp.float32)         # (1, T)

    # accumulate scalar partials (lane reductions) into resident (1,1) output blocks
    ce_num_ref[...] += jnp.sum(valid * w_pix * nll, axis=1, keepdims=True)
    ce_den_ref[...] += jnp.sum(valid * w_pix, axis=1, keepdims=True)
    inter_ref[...] += jnp.sum(pt * has_lab, axis=1, keepdims=True)
    onehot_ref[...] += jnp.sum(has_lab, axis=1, keepdims=True)
    focal_ref[...] += jnp.sum(focal, axis=1, keepdims=True)


def ce_dice_loss(output_nchw, target_nhw, class_weight=CLASS_WEIGHTS):
    N, C, H, W = output_nchw.shape
    HW = H * W
    P = N * HW

    tile = min(MAX_TILE_HW, max(128, ((HW + 127) // 128) * 128))
    num_tiles = -(-HW // tile)
    hwp = num_tiles * tile

    # free reshapes, no transpose; keep the model's native dtype (bf16 or f32)
    logits = output_nchw.reshape(N, C, HW)
    target = target_nhw.reshape(N, 1, HW).astype(jnp.int32)
    if hwp != HW:
        # pad pixels: logits=0 (uniform softmax), target=ignore -> zero contribution
        logits = jnp.pad(logits, ((0, 0), (0, 0), (0, hwp - HW)))
        target = jnp.pad(target, ((0, 0), (0, 0), (0, hwp - HW)),
                         constant_values=IGNORE_INDEX_CE)
    weight = class_weight.reshape(1, C, 1).astype(jnp.float32)

    partial = jax.ShapeDtypeStruct((N, 1, 1), jnp.float32)
    out_spec = pl.BlockSpec((None, 1, 1), lambda n, t: (n, 0, 0))

    itemsize = jnp.dtype(logits.dtype).itemsize
    cost = pl.CostEstimate(
        flops=int(P * (12 * C + 24)),
        transcendentals=int(P * (C + 2)),
        bytes_accessed=int(N * C * hwp * itemsize + N * hwp * 4 + C * 4 + N * 5 * 4),
    )

    ce_num, ce_den, inter, onehot_sum, focal_sum = pl.pallas_call(
        ce_dice_kernel,
        out_shape=(partial, partial, partial, partial, partial),
        grid_spec=pltpu.PrefetchScalarGridSpec(
            num_scalar_prefetch=0,
            grid=(N, num_tiles),
            in_specs=[
                pl.BlockSpec((None, C, tile), lambda n, t: (n, 0, t)),
                pl.BlockSpec((None, 1, tile), lambda n, t: (n, 0, t)),
                pl.BlockSpec((None, C, 1), lambda n, t: (0, 0, 0)),
            ],
            out_specs=[out_spec, out_spec, out_spec, out_spec, out_spec],
        ),
        compiler_params=pltpu.CompilerParams(
            dimension_semantics=("parallel", "arbitrary")),
        cost_estimate=cost,
    )(logits, target, weight)

    # tiny scalar epilogue in plain JAX (N*5 floats)
    ce_num = jnp.sum(ce_num)
    ce_den = jnp.sum(ce_den)
    inter = jnp.sum(inter)
    onehot_sum = jnp.sum(onehot_sum)
    focal_sum = jnp.sum(focal_sum)

    ce_loss = ce_num / jnp.maximum(ce_den, 1e-12)      # guard: all-ignored batch
    prob_sum = jnp.float32(P)                          # softmax rows sum to 1 (analytic)
    dice_loss = 1.0 - (2.0 * inter + SMOOTH_DICE) / (prob_sum + onehot_sum + SMOOTH_DICE)
    focal_loss = focal_sum / jnp.float32(P)

    return 3.0 * ce_loss + dice_loss + 2.0 * focal_loss


def ce_dice_loss_ref(output_nchw, target_nhw, class_weight=CLASS_WEIGHTS):
    """Pure-JAX reference mirroring the PyTorch module semantics."""
    N, C, H, W = output_nchw.shape
    logits = jnp.transpose(output_nchw, (0, 2, 3, 1)).reshape(-1, C).astype(jnp.float32)
    t = target_nhw.reshape(-1).astype(jnp.int32)
    logp = jax.nn.log_softmax(logits, axis=-1)
    p = jax.nn.softmax(logits, axis=-1)
    onehot = jax.nn.one_hot(t, C, dtype=jnp.float32)
    nll = -jnp.sum(logp * onehot, axis=-1)
    w = jnp.sum(class_weight[None, :] * onehot, axis=-1)
    valid = (t != IGNORE_INDEX_CE)
    ce = jnp.sum(jnp.where(valid, w * nll, 0.0)) / jnp.sum(jnp.where(valid, w, 0.0))
    inter = jnp.sum(p * onehot)
    dice = 1.0 - (2.0 * inter + SMOOTH_DICE) / (jnp.sum(p) + jnp.sum(onehot) + SMOOTH_DICE)
    pt = jnp.exp(-nll)
    focal = jnp.mean((1.0 - pt) ** GAMMA * nll)
    return 3.0 * ce + dice + 2.0 * focal


if __name__ == "__main__":
    key = jax.random.PRNGKey(0)
    k1, k2 = jax.random.split(key)

    N, C, H, W = 2, 6, 16, 16      # C=6 to match the hard-coded class weights
    output = jax.random.normal(k1, (N, C, H, W), dtype=jnp.float32)
    target = jax.random.randint(k2, (N, H, W), 0, C, dtype=jnp.int32)

    # TODO(synk): DiceLoss's in-place remap of ignore_index=-1 labels is a no-op for
    # valid class labels; ignore-255 pixels (none in this test) follow one-hot-zero
    # semantics in Dice/Focal, matching the JAX reference.
    loss = jax.block_until_ready(ce_dice_loss(output, target))
    ref = ce_dice_loss_ref(output, target)
    assert jnp.allclose(loss, ref, rtol=1e-4, atol=1e-5), (loss, ref)

    print("KERNEL_OK")
</pallas_src>

<mosaic_0001>
module attributes {stable_mosaic.version = 11 : i64} {
  func.func @ce_dice_kernel(%arg0: i32, %arg1: i32, %arg2: memref<1x6x256xf32, #tpu.memory_space<vmem>>, %arg3: memref<1x1x256xi32, #tpu.memory_space<vmem>>, %arg4: memref<1x6x1xf32, #tpu.memory_space<vmem>>, %arg5: memref<1x1x1xf32, #tpu.memory_space<vmem>>, %arg6: memref<1x1x1xf32, #tpu.memory_space<vmem>>, %arg7: memref<1x1x1xf32, #tpu.memory_space<vmem>>, %arg8: memref<1x1x1xf32, #tpu.memory_space<vmem>>, %arg9: memref<1x1x1xf32, #tpu.memory_space<vmem>>) attributes {dimension_semantics = [#tpu.dimension_semantics<parallel>, #tpu.dimension_semantics<arbitrary>], iteration_bounds = array<i64: 2, 1>, scalar_prefetch = 0 : i64, scratch_operands = 0 : i64, tpu.core_type = #tpu.core_type<tc>, window_params = [{transform_indices = @transform_0, window_bounds = array<i64: 1, 6, 256>}, {transform_indices = @transform_1, window_bounds = array<i64: 1, 1, 256>}, {pipeline_mode = #tpu.pipeline_mode<synchronous>, transform_indices = @transform_2, window_bounds = array<i64: 1, 6, 1>}, {transform_indices = @transform_3, window_bounds = array<i64: 1, 1, 1>}, {transform_indices = @transform_4, window_bounds = array<i64: 1, 1, 1>}, {transform_indices = @transform_5, window_bounds = array<i64: 1, 1, 1>}, {transform_indices = @transform_6, window_bounds = array<i64: 1, 1, 1>}, {transform_indices = @transform_7, window_bounds = array<i64: 1, 1, 1>}]} {
    %c0_i32 = arith.constant 0 : i32
    %0 = arith.cmpi eq, %arg1, %c0_i32 : i32
    %1 = arith.extui %0 : i1 to i32
    %c0_i32_0 = arith.constant 0 : i32
    %2 = arith.cmpi ne, %1, %c0_i32_0 : i32
    scf.if %2 {
      %cst_50 = arith.constant 0.000000e+00 : f32
      %88 = vector.broadcast %cst_50 : f32 to vector<1x1xf32>
      %c0_51 = arith.constant 0 : index
      %c0_52 = arith.constant 0 : index
      %c0_53 = arith.constant 0 : index
      %89 = vector.load %arg5[%c0_51, %c0_52, %c0_53] : memref<1x1x1xf32, #tpu.memory_space<vmem>>, vector<1x1x1xf32>
      %90 = vector.shape_cast %89 : vector<1x1x1xf32> to vector<1x1xf32>
      %91 = vector.shape_cast %88 : vector<1x1xf32> to vector<1x1x1xf32>
      tpu.vector_store %arg5[%c0_51, %c0_52, %c0_53], %91 {strides = array<i32>} : memref<1x1x1xf32, #tpu.memory_space<vmem>>, vector<1x1x1xf32>,
      %cst_54 = arith.constant 0.000000e+00 : f32
      %92 = vector.broadcast %cst_54 : f32 to vector<1x1xf32>
      %c0_55 = arith.constant 0 : index
      %c0_56 = arith.constant 0 : index
      %c0_57 = arith.constant 0 : index
      %93 = vector.load %arg6[%c0_55, %c0_56, %c0_57] : memref<1x1x1xf32, #tpu.memory_space<vmem>>, vector<1x1x1xf32>
      %94 = vector.shape_cast %93 : vector<1x1x1xf32> to vector<1x1xf32>
      %95 = vector.shape_cast %92 : vector<1x1xf32> to vector<1x1x1xf32>
      tpu.vector_store %arg6[%c0_55, %c0_56, %c0_57], %95 {strides = array<i32>} : memref<1x1x1xf32, #tpu.memory_space<vmem>>, vector<1x1x1xf32>,
      %cst_58 = arith.constant 0.000000e+00 : f32
      %96 = vector.broadcast %cst_58 : f32 to vector<1x1xf32>
      %c0_59 = arith.constant 0 : index
      %c0_60 = arith.constant 0 : index
      %c0_61 = arith.constant 0 : index
      %97 = vector.load %arg7[%c0_59, %c0_60, %c0_61] : memref<1x1x1xf32, #tpu.memory_space<vmem>>, vector<1x1x1xf32>
      %98 = vector.shape_cast %97 : vector<1x1x1xf32> to vector<1x1xf32>
      %99 = vector.shape_cast %96 : vector<1x1xf32> to vector<1x1x1xf32>
      tpu.vector_store %arg7[%c0_59, %c0_60, %c0_61], %99 {strides = array<i32>} : memref<1x1x1xf32, #tpu.memory_space<vmem>>, vector<1x1x1xf32>,
      %cst_62 = arith.constant 0.000000e+00 : f32
      %100 = vector.broadcast %cst_62 : f32 to vector<1x1xf32>
      %c0_63 = arith.constant 0 : index
      %c0_64 = arith.constant 0 : index
      %c0_65 = arith.constant 0 : index
      %101 = vector.load %arg8[%c0_63, %c0_64, %c0_65] : memref<1x1x1xf32, #tpu.memory_space<vmem>>, vector<1x1x1xf32>
      %102 = vector.shape_cast %101 : vector<1x1x1xf32> to vector<1x1xf32>
      %103 = vector.shape_cast %100 : vector<1x1xf32> to vector<1x1x1xf32>
      tpu.vector_store %arg8[%c0_63, %c0_64, %c0_65], %103 {strides = array<i32>} : memref<1x1x1xf32, #tpu.memory_space<vmem>>, vector<1x1x1xf32>,
      %cst_66 = arith.constant 0.000000e+00 : f32
      %104 = vector.broadcast %cst_66 : f32 to vector<1x1xf32>
      %c0_67 = arith.constant 0 : index
      %c0_68 = arith.constant 0 : index
      %c0_69 = arith.constant 0 : index
      %105 = vector.load %arg9[%c0_67, %c0_68, %c0_69] : memref<1x1x1xf32, #tpu.memory_space<vmem>>, vector<1x1x1xf32>
      %106 = vector.shape_cast %105 : vector<1x1x1xf32> to vector<1x1xf32>
      %107 = vector.shape_cast %104 : vector<1x1xf32> to vector<1x1x1xf32>
      tpu.vector_store %arg9[%c0_67, %c0_68, %c0_69], %107 {strides = array<i32>} : memref<1x1x1xf32, #tpu.memory_space<vmem>>, vector<1x1x1xf32>,
    } else {
    }
    %c0 = arith.constant 0 : index
    %c0_1 = arith.constant 0 : index
    %c0_2 = arith.constant 0 : index
    %3 = vector.load %arg2[%c0, %c0_1, %c0_2] : memref<1x6x256xf32, #tpu.memory_space<vmem>>, vector<1x6x256xf32>
    %4 = vector.shape_cast %3 : vector<1x6x256xf32> to vector<6x256xf32>
    %c0_3 = arith.constant 0 : index
    %c0_4 = arith.constant 0 : index
    %c0_5 = arith.constant 0 : index
    %5 = vector.load %arg3[%c0_3, %c0_4, %c0_5] : memref<1x1x256xi32, #tpu.memory_space<vmem>>, vector<1x1x256xi32>
    %6 = vector.shape_cast %5 : vector<1x1x256xi32> to vector<1x256xi32>
    %c0_6 = arith.constant 0 : index
    %c0_7 = arith.constant 0 : index
    %c0_8 = arith.constant 0 : index
    %7 = vector.load %arg4[%c0_6, %c0_7, %c0_8] : memref<1x6x1xf32, #tpu.memory_space<vmem>>, vector<1x6x1xf32>
    %8 = vector.shape_cast %7 : vector<1x6x1xf32> to vector<6x1xf32>
    %9 = tpu.iota {dimensions = array<i32: 0>} : vector<6x256xi32>
    %10 = vector.broadcast %6 : vector<1x256xi32> to vector<6x256xi32>
    %11 = arith.cmpi eq, %9, %10 : vector<6x256xi32>
    %12 = arith.extui %11 : vector<6x256xi1> to vector<6x256xi32>
    %13 = arith.sitofp %12 : vector<6x256xi32> to vector<6x256xf32>
    %cst = arith.constant dense<0xFF800000> : vector<256xf32>
    %14 = vector.multi_reduction <maximumf>, %4, %cst [0] : vector<6x256xf32> to vector<256xf32>
    %15 = vector.shape_cast %14 : vector<256xf32> to vector<1x256xf32>
    %16 = vector.broadcast %15 : vector<1x256xf32> to vector<6x256xf32>
    %17 = arith.subf %4, %16 : vector<6x256xf32>
    %18 = math.exp %17 : vector<6x256xf32>
    %cst_9 = arith.constant dense<0.000000e+00> : vector<256xf32>
    %19 = vector.multi_reduction <add>, %18, %cst_9 [0] : vector<6x256xf32> to vector<256xf32>
    %20 = vector.shape_cast %19 : vector<256xf32> to vector<1x256xf32>
    %21 = math.log %20 : vector<1x256xf32>
    %22 = arith.mulf %17, %13 : vector<6x256xf32>
    %cst_10 = arith.constant dense<0.000000e+00> : vector<256xf32>
    %23 = vector.multi_reduction <add>, %22, %cst_10 [0] : vector<6x256xf32> to vector<256xf32>
    %24 = vector.shape_cast %23 : vector<256xf32> to vector<1x256xf32>
    %cst_11 = arith.constant dense<0.000000e+00> : vector<256xf32>
    %25 = vector.multi_reduction <add>, %13, %cst_11 [0] : vector<6x256xf32> to vector<256xf32>
    %26 = vector.shape_cast %25 : vector<256xf32> to vector<1x256xf32>
    %27 = vector.broadcast %8 : vector<6x1xf32> to vector<6x256xf32>
    %28 = arith.mulf %27, %13 : vector<6x256xf32>
    %cst_12 = arith.constant dense<0.000000e+00> : vector<256xf32>
    %29 = vector.multi_reduction <add>, %28, %cst_12 [0] : vector<6x256xf32> to vector<256xf32>
    %30 = vector.shape_cast %29 : vector<256xf32> to vector<1x256xf32>
    %31 = arith.subf %21, %24 : vector<1x256xf32>
    %32 = arith.mulf %31, %26 : vector<1x256xf32>
    %cst_13 = arith.constant 0.000000e+00 : f32
    %33 = vector.broadcast %cst_13 : f32 to vector<1x256xf32>
    %34 = arith.subf %33, %32 : vector<1x256xf32>
    %35 = math.exp %34 : vector<1x256xf32>
    %cst_14 = arith.constant 1.000000e+00 : f32
    %36 = vector.broadcast %cst_14 : f32 to vector<1x256xf32>
    %37 = arith.subf %36, %35 : vector<1x256xf32>
    %38 = arith.mulf %37, %37 : vector<1x256xf32>
    %39 = arith.mulf %38, %32 : vector<1x256xf32>
    %c255_i32 = arith.constant 255 : i32
    %40 = vector.broadcast %c255_i32 : i32 to vector<1x256xi32>
    %41 = arith.cmpi ne, %6, %40 : vector<1x256xi32>
    %42 = arith.extui %41 : vector<1x256xi1> to vector<1x256xi32>
    %43 = arith.sitofp %42 : vector<1x256xi32> to vector<1x256xf32>
    %c0_15 = arith.constant 0 : index
    %c0_16 = arith.constant 0 : index
    %c0_17 = arith.constant 0 : index
    %44 = vector.load %arg5[%c0_15, %c0_16, %c0_17] : memref<1x1x1xf32, #tpu.memory_space<vmem>>, vector<1x1x1xf32>
    %45 = vector.shape_cast %44 : vector<1x1x1xf32> to vector<1x1xf32>
    %46 = arith.mulf %43, %30 : vector<1x256xf32>
    %47 = arith.mulf %46, %32 : vector<1x256xf32>
    %cst_18 = arith.constant dense<0.000000e+00> : vector<1xf32>
    %48 = vector.multi_reduction <add>, %47, %cst_18 [1] : vector<1x256xf32> to vector<1xf32>
    %49 = vector.shape_cast %48 : vector<1xf32> to vector<1x1xf32>
    %50 = arith.addf %45, %49 : vector<1x1xf32>
    %c0_19 = arith.constant 0 : index
    %c0_20 = arith.constant 0 : index
    %c0_21 = arith.constant 0 : index
    %51 = vector.load %arg5[%c0_19, %c0_20, %c0_21] : memref<1x1x1xf32, #tpu.memory_space<vmem>>, vector<1x1x1xf32>
    %52 = vector.shape_cast %51 : vector<1x1x1xf32> to vector<1x1xf32>
    %53 = vector.shape_cast %50 : vector<1x1xf32> to vector<1x1x1xf32>
    tpu.vector_store %arg5[%c0_19, %c0_20, %c0_21], %53 {strides = array<i32>} : memref<1x1x1xf32, #tpu.memory_space<vmem>>, vector<1x1x1xf32>,
    %c0_22 = arith.constant 0 : index
    %c0_23 = arith.constant 0 : index
    %c0_24 = arith.constant 0 : index
    %54 = vector.load %arg6[%c0_22, %c0_23, %c0_24] : memref<1x1x1xf32, #tpu.memory_space<vmem>>, vector<1x1x1xf32>
    %55 = vector.shape_cast %54 : vector<1x1x1xf32> to vector<1x1xf32>
    %56 = arith.mulf %43, %30 : vector<1x256xf32>
    %cst_25 = arith.constant dense<0.000000e+00> : vector<1xf32>
    %57 = vector.multi_reduction <add>, %56, %cst_25 [1] : vector<1x256xf32> to vector<1xf32>
    %58 = vector.shape_cast %57 : vector<1xf32> to vector<1x1xf32>
    %59 = arith.addf %55, %58 : vector<1x1xf32>
    %c0_26 = arith.constant 0 : index
    %c0_27 = arith.constant 0 : index
    %c0_28 = arith.constant 0 : index
    %60 = vector.load %arg6[%c0_26, %c0_27, %c0_28] : memref<1x1x1xf32, #tpu.memory_space<vmem>>, vector<1x1x1xf32>
    %61 = vector.shape_cast %60 : vector<1x1x1xf32> to vector<1x1xf32>
    %62 = vector.shape_cast %59 : vector<1x1xf32> to vector<1x1x1xf32>
    tpu.vector_store %arg6[%c0_26, %c0_27, %c0_28], %62 {strides = array<i32>} : memref<1x1x1xf32, #tpu.memory_space<vmem>>, vector<1x1x1xf32>,
    %c0_29 = arith.constant 0 : index
    %c0_30 = arith.constant 0 : index
    %c0_31 = arith.constant 0 : index
    %63 = vector.load %arg7[%c0_29, %c0_30, %c0_31] : memref<1x1x1xf32, #tpu.memory_space<vmem>>, vector<1x1x1xf32>
    %64 = vector.shape_cast %63 : vector<1x1x1xf32> to vector<1x1xf32>
    %65 = arith.mulf %35, %26 : vector<1x256xf32>
    %cst_32 = arith.constant dense<0.000000e+00> : vector<1xf32>
    %66 = vector.multi_reduction <add>, %65, %cst_32 [1] : vector<1x256xf32> to vector<1xf32>
    %67 = vector.shape_cast %66 : vector<1xf32> to vector<1x1xf32>
    %68 = arith.addf %64, %67 : vector<1x1xf32>
    %c0_33 = arith.constant 0 : index
    %c0_34 = arith.constant 0 : index
    %c0_35 = arith.constant 0 : index
    %69 = vector.load %arg7[%c0_33, %c0_34, %c0_35] : memref<1x1x1xf32, #tpu.memory_space<vmem>>, vector<1x1x1xf32>
    %70 = vector.shape_cast %69 : vector<1x1x1xf32> to vector<1x1xf32>
    %71 = vector.shape_cast %68 : vector<1x1xf32> to vector<1x1x1xf32>
    tpu.vector_store %arg7[%c0_33, %c0_34, %c0_35], %71 {strides = array<i32>} : memref<1x1x1xf32, #tpu.memory_space<vmem>>, vector<1x1x1xf32>,
    %c0_36 = arith.constant 0 : index
    %c0_37 = arith.constant 0 : index
    %c0_38 = arith.constant 0 : index
    %72 = vector.load %arg8[%c0_36, %c0_37, %c0_38] : memref<1x1x1xf32, #tpu.memory_space<vmem>>, vector<1x1x1xf32>
    %73 = vector.shape_cast %72 : vector<1x1x1xf32> to vector<1x1xf32>
    %cst_39 = arith.constant dense<0.000000e+00> : vector<1xf32>
    %74 = vector.multi_reduction <add>, %26, %cst_39 [1] : vector<1x256xf32> to vector<1xf32>
    %75 = vector.shape_cast %74 : vector<1xf32> to vector<1x1xf32>
    %76 = arith.addf %73, %75 : vector<1x1xf32>
    %c0_40 = arith.constant 0 : index
    %c0_41 = arith.constant 0 : index
    %c0_42 = arith.constant 0 : index
    %77 = vector.load %arg8[%c0_40, %c0_41, %c0_42] : memref<1x1x1xf32, #tpu.memory_space<vmem>>, vector<1x1x1xf32>
    %78 = vector.shape_cast %77 : vector<1x1x1xf32> to vector<1x1xf32>
    %79 = vector.shape_cast %76 : vector<1x1xf32> to vector<1x1x1xf32>
    tpu.vector_store %arg8[%c0_40, %c0_41, %c0_42], %79 {strides = array<i32>} : memref<1x1x1xf32, #tpu.memory_space<vmem>>, vector<1x1x1xf32>,
    %c0_43 = arith.constant 0 : index
    %c0_44 = arith.constant 0 : index
    %c0_45 = arith.constant 0 : index
    %80 = vector.load %arg9[%c0_43, %c0_44, %c0_45] : memref<1x1x1xf32, #tpu.memory_space<vmem>>, vector<1x1x1xf32>
    %81 = vector.shape_cast %80 : vector<1x1x1xf32> to vector<1x1xf32>
    %cst_46 = arith.constant dense<0.000000e+00> : vector<1xf32>
    %82 = vector.multi_reduction <add>, %39, %cst_46 [1] : vector<1x256xf32> to vector<1xf32>
    %83 = vector.shape_cast %82 : vector<1xf32> to vector<1x1xf32>
    %84 = arith.addf %81, %83 : vector<1x1xf32>
    %c0_47 = arith.constant 0 : index
    %c0_48 = arith.constant 0 : index
    %c0_49 = arith.constant 0 : index
    %85 = vector.load %arg9[%c0_47, %c0_48, %c0_49] : memref<1x1x1xf32, #tpu.memory_space<vmem>>, vector<1x1x1xf32>
    %86 = vector.shape_cast %85 : vector<1x1x1xf32> to vector<1x1xf32>
    %87 = vector.shape_cast %84 : vector<1x1xf32> to vector<1x1x1xf32>
    tpu.vector_store %arg9[%c0_47, %c0_48, %c0_49], %87 {strides = array<i32>} : memref<1x1x1xf32, #tpu.memory_space<vmem>>, vector<1x1x1xf32>,
    return
  }
  func.func @transform_0(%arg0: i32, %arg1: i32) -> (i32, i32, i32) {
    %c0_i32 = arith.constant 0 : i32
    %c0_i32_0 = arith.constant 0 : i32
    return %arg0, %c0_i32, %arg1 : i32, i32, i32
  }
  func.func @transform_1(%arg0: i32, %arg1: i32) -> (i32, i32, i32) {
    %c0_i32 = arith.constant 0 : i32
    %c0_i32_0 = arith.constant 0 : i32
    return %arg0, %c0_i32, %arg1 : i32, i32, i32
  }
  func.func @transform_2(%arg0: i32, %arg1: i32) -> (i32, i32, i32) {
    %c0_i32 = arith.constant 0 : i32
    %c0_i32_0 = arith.constant 0 : i32
    %c0_i32_1 = arith.constant 0 : i32
    %c0_i32_2 = arith.constant 0 : i32
    return %c0_i32, %c0_i32_0, %c0_i32_1 : i32, i32, i32
  }
  func.func @transform_3(%arg0: i32, %arg1: i32) -> (i32, i32, i32) {
    %c0_i32 = arith.constant 0 : i32
    %c0_i32_0 = arith.constant 0 : i32
    %c0_i32_1 = arith.constant 0 : i32
    return %arg0, %c0_i32, %c0_i32_0 : i32, i32, i32
  }
  func.func @transform_4(%arg0: i32, %arg1: i32) -> (i32, i32, i32) {
    %c0_i32 = arith.constant 0 : i32
    %c0_i32_0 = arith.constant 0 : i32
    %c0_i32_1 = arith.constant 0 : i32
    return %arg0, %c0_i32, %c0_i32_0 : i32, i32, i32
  }
  func.func @transform_5(%arg0: i32, %arg1: i32) -> (i32, i32, i32) {
    %c0_i32 = arith.constant 0 : i32
    %c0_i32_0 = arith.constant 0 : i32
    %c0_i32_1 = arith.constant 0 : i32
    return %arg0, %c0_i32, %c0_i32_0 : i32, i32, i32
  }
  func.func @transform_6(%arg0: i32, %arg1: i32) -> (i32, i32, i32) {
    %c0_i32 = arith.constant 0 : i32
    %c0_i32_0 = arith.constant 0 : i32
    %c0_i32_1 = arith.constant 0 : i32
    return %arg0, %c0_i32, %c0_i32_0 : i32, i32, i32
  }
  func.func @transform_7(%arg0: i32, %arg1: i32) -> (i32, i32, i32) {
    %c0_i32 = arith.constant 0 : i32
    %c0_i32_0 = arith.constant 0 : i32
    %c0_i32_1 = arith.constant 0 : i32
    return %arg0, %c0_i32, %c0_i32_0 : i32, i32, i32
  }
}

</mosaic_0001>

<llo_original>
// kernel: tpu_custom_call.1
$region0: #{tpu_custom_call.1}
  #allocation0 [shape = 'u32[]', space=smem, size = 0x4, offset = 0x4, fixed_abs, tag = 'smem constant byte address 0x4 - core index']
  #allocation1 [shape = 'u32[144,128]{1,0:T(1,128)}', space=vmem, size = 0x12000, scoped, tag = 'internal scratch']
  %s0 = inlined_call_operand.vmem [shape: f32[2,6,256], index: 0, kind: input, shape index: {}]
  %s1 = inlined_call_operand.vmem [shape: s32[2,1,256], index: 1, kind: input, shape index: {}]
  %s2 = inlined_call_operand.vmem [shape: f32[1,6,1], index: 2, kind: input, shape index: {}]
  %s3 = inlined_call_operand.vmem [shape: f32[2,1,1], index: 3, kind: output, shape index: {0}]
  %s4 = inlined_call_operand.vmem [shape: f32[2,1,1], index: 4, kind: output, shape index: {1}]
  %s5 = inlined_call_operand.vmem [shape: f32[2,1,1], index: 5, kind: output, shape index: {2}]
  %s6 = inlined_call_operand.vmem [shape: f32[2,1,1], index: 6, kind: output, shape index: {3}]
  %s7 = inlined_call_operand.vmem [shape: f32[2,1,1], index: 7, kind: output, shape index: {4}]
  %8 = xla_tuple %s3, %s4, %s5, %s6, %s7
  %s9 = sld [smem:[#allocation0]]
  $region81: #{tpu_custom_call.1} parent=0
    _
  %s11 = ssub.s32 1, %s9
  %s12 = scalar_select 0, %s11, %s9
  loop: start=0, step=1, limit=4
  $region2: #{tpu_custom_call.1} parent=0 // loop_pre_header
    _
  $region3: #{tpu_custom_call.1} parent=0 // loop_header
    %s14 = sphi 0, %s18
    %p15 = scmp.ge.s32.totalorder %s14, 4
    %s21 = sphi 0, %s33
    %s22 = sphi 0, %s29
    %s23 = sphi 0, %s21
    %s24 = sphi 0, %s22
    %s25 = sphi 0, %s23
    %s26 = sphi 0, %s24
    %s38 = sphi 0, %s40
    %s41 = sphi 0, %s38
    %s42 = sphi 0, %s41
    %s58 = sphi 0, %s42
    %s66 = sphi 0, %s68
    %s69 = sphi 0, %s66
    %s70 = sphi 0, %s69
    %s86 = sphi 0, %s70
    %s90 = sphi 0, %s90
    %s92 = sphi 0, %s90
    %s93 = sphi 0, %s92
    %s107 = sphi 0, %s93
    %s113 = sphi 0, %s115
    %s116 = sphi 0, %s113
    %s117 = sphi 0, %s116
    %s133 = sphi 0, %s117
    %s139 = sphi 0, %s141
    %s142 = sphi 0, %s139
    %s143 = sphi 0, %s142
    %s159 = sphi 0, %s143
    %s165 = sphi 0, %s167
    %s168 = sphi 0, %s165
    %s169 = sphi 0, %s168
    %s185 = sphi 0, %s169
    %s191 = sphi 0, %s193
    %s194 = sphi 0, %s191
    %s195 = sphi 0, %s194
    %s211 = sphi 0, %s195
    %s217 = sphi 0, %s219
    %s220 = sphi 0, %s217
    %s221 = sphi 0, %s220
    %s237 = sphi 0, %s221
  $region4: #{tpu_custom_call.1} parent=0 // loop_header_branch
    %17 = sbr.rel (%p15) target = $region8
  $region5: #{tpu_custom_call.1} parent=0 // loop_body
    %s19 = ssub.s32 %s14, 1
    %s20 = ssub.s32 %s14, 2
    %s27 = sadd.s32 1, %s22
    %p28 = scmp.ge.s32.totalorder %s27, 1
    %s29 = scalar_select %p28, 0, %s27
    %s30 = sadd.s32 1, %s21
    %s31 = scalar_select %p28, %s30, %s21
    %p32 = scmp.ge.s32.totalorder %s31, 2
    %s33 = scalar_select %p32, 0, %s31
    %s34 = ssub.s32 %s21, %s33
    %s35 = ssub.s32 %s22, %s29
    %s36 = sor.u32 %s34, %s35
    %p37 = scmp.eq.s32.totalorder %s36, 0
    %s39 = sadd.s32 %s38, 1
    %s40 = scalar_select %p37, %s38, %s39
    %p43 = pneg %p37
    %p44 = scmp.eq.s32.totalorder %s14, 1
    %p45 = por %p43, %p44
    %p46 = scmp.ne.s32.totalorder %s38, %s41
    %p47 = scmp.eq.s32.totalorder %s14, 0
    %p48 = por %p46, %p47
    %p49 = scmp.ne.s32.totalorder %s38, %s41
    %p50 = scmp.eq.s32.totalorder %s19, 1
    %p51 = por %p49, %p50
    %p52 = scmp.ne.s32.totalorder %s41, %s42
    %p53 = scmp.eq.s32.totalorder %s19, 0
    %p54 = por %p52, %p53
    %p55 = scmp.ne.s32.totalorder %s41, %s42
    %p56 = scmp.eq.s32.totalorder %s20, 1
    %p57 = por %p55, %p56
    %p59 = scmp.ne.s32.totalorder %s42, %s58
    %p60 = scmp.eq.s32.totalorder %s20, 0
    %p61 = por %p59, %p60
    %s62 = ssub.s32 %s21, %s33
    %s63 = ssub.s32 %s22, %s29
    %s64 = sor.u32 %s62, %s63
    %p65 = scmp.eq.s32.totalorder %s64, 0
    %s67 = sadd.s32 %s66, 1
    %s68 = scalar_select %p65, %s66, %s67
    %p71 = pneg %p65
    %p72 = scmp.eq.s32.totalorder %s14, 1
    %p73 = por %p71, %p72
    %p74 = scmp.ne.s32.totalorder %s66, %s69
    %p75 = scmp.eq.s32.totalorder %s14, 0
    %p76 = por %p74, %p75
    %p77 = scmp.ne.s32.totalorder %s66, %s69
    %p78 = scmp.eq.s32.totalorder %s19, 1
    %p79 = por %p77, %p78
    %p80 = scmp.ne.s32.totalorder %s69, %s70
    %p81 = scmp.eq.s32.totalorder %s19, 0
    %p82 = por %p80, %p81
    %p83 = scmp.ne.s32.totalorder %s69, %s70
    %p84 = scmp.eq.s32.totalorder %s20, 1
    %p85 = por %p83, %p84
    %p87 = scmp.ne.s32.totalorder %s70, %s86
    %p88 = scmp.eq.s32.totalorder %s20, 0
    %p89 = por %p87, %p88
    %s91 = sadd.s32 %s90, 1
    %p94 = scmp.eq.s32.totalorder %s14, 1
    %p95 = scmp.ne.s32.totalorder %s90, %s92
    %p96 = scmp.eq.s32.totalorder %s14, 0
    %p97 = por %p95, %p96
    %p98 = scmp.ne.s32.totalorder %s90, %s92
    %p99 = scmp.eq.s32.totalorder %s19, 1
    %p100 = por %p98, %p99
    %p101 = scmp.ne.s32.totalorder %s92, %s93
    %p102 = scmp.eq.s32.totalorder %s19, 0
    %p103 = por %p101, %p102
    %p104 = scmp.ne.s32.totalorder %s92, %s93
    %p105 = scmp.eq.s32.totalorder %s20, 1
    %p106 = por %p104, %p105
    %p108 = scmp.ne.s32.totalorder %s93, %s107
    %p109 = scmp.eq.s32.totalorder %s20, 0
    %p110 = por %p108, %p109
    %s111 = ssub.s32 %s21, %s33
    %p112 = scmp.eq.s32.totalorder %s111, 0
    %s114 = sadd.s32 %s113, 1
    %s115 = scalar_select %p112, %s113, %s114
    %p118 = pneg %p112
    %p119 = scmp.eq.s32.totalorder %s14, 1
    %p120 = por %p118, %p119
    %p121 = scmp.ne.s32.totalorder %s113, %s116
    %p122 = scmp.eq.s32.totalorder %s14, 0
    %p123 = por %p121, %p122
    %p124 = scmp.ne.s32.totalorder %s113, %s116
    %p125 = scmp.eq.s32.totalorder %s19, 1
    %p126 = por %p124, %p125
    %p127 = scmp.ne.s32.totalorder %s116, %s117
    %p128 = scmp.eq.s32.totalorder %s19, 0
    %p129 = por %p127, %p128
    %p130 = scmp.ne.s32.totalorder %s116, %s117
    %p131 = scmp.eq.s32.totalorder %s20, 1
    %p132 = por %p130, %p131
    %p134 = scmp.ne.s32.totalorder %s117, %s133
    %p135 = scmp.eq.s32.totalorder %s20, 0
    %p136 = por %p134, %p135
    %s137 = ssub.s32 %s21, %s33
    %p138 = scmp.eq.s32.totalorder %s137, 0
    %s140 = sadd.s32 %s139, 1
    %s141 = scalar_select %p138, %s139, %s140
    %p144 = pneg %p138
    %p145 = scmp.eq.s32.totalorder %s14, 1
    %p146 = por %p144, %p145
    %p147 = scmp.ne.s32.totalorder %s139, %s142
    %p148 = scmp.eq.s32.totalorder %s14, 0
    %p149 = por %p147, %p148
    %p150 = scmp.ne.s32.totalorder %s139, %s142
    %p151 = scmp.eq.s32.totalorder %s19, 1
    %p152 = por %p150, %p151
    %p153 = scmp.ne.s32.totalorder %s142, %s143
    %p154 = scmp.eq.s32.totalorder %s19, 0
    %p155 = por %p153, %p154
    %p156 = scmp.ne.s32.totalorder %s142, %s143
    %p157 = scmp.eq.s32.totalorder %s20, 1
    %p158 = por %p156, %p157
    %p160 = scmp.ne.s32.totalorder %s143, %s159
    %p161 = scmp.eq.s32.totalorder %s20, 0
    %p162 = por %p160, %p161
    %s163 = ssub.s32 %s21, %s33
    %p164 = scmp.eq.s32.totalorder %s163, 0
    %s166 = sadd.s32 %s165, 1
    %s167 = scalar_select %p164, %s165, %s166
    %p170 = pneg %p164
    %p171 = scmp.eq.s32.totalorder %s14, 1
    %p172 = por %p170, %p171
    %p173 = scmp.ne.s32.totalorder %s165, %s168
    %p174 = scmp.eq.s32.totalorder %s14, 0
    %p175 = por %p173, %p174
    %p176 = scmp.ne.s32.totalorder %s165, %s168
    %p177 = scmp.eq.s32.totalorder %s19, 1
    %p178 = por %p176, %p177
    %p179 = scmp.ne.s32.totalorder %s168, %s169
    %p180 = scmp.eq.s32.totalorder %s19, 0
    %p181 = por %p179, %p180
    %p182 = scmp.ne.s32.totalorder %s168, %s169
    %p183 = scmp.eq.s32.totalorder %s20, 1
    %p184 = por %p182, %p183
    %p186 = scmp.ne.s32.totalorder %s169, %s185
    %p187 = scmp.eq.s32.totalorder %s20, 0
    %p188 = por %p186, %p187
    %s189 = ssub.s32 %s21, %s33
    %p190 = scmp.eq.s32.totalorder %s189, 0
    %s192 = sadd.s32 %s191, 1
    %s193 = scalar_select %p190, %s191, %s192
    %p196 = pneg %p190
    %p197 = scmp.eq.s32.totalorder %s14, 1
    %p198 = por %p196, %p197
    %p199 = scmp.ne.s32.totalorder %s191, %s194
    %p200 = scmp.eq.s32.totalorder %s14, 0
    %p201 = por %p199, %p200
    %p202 = scmp.ne.s32.totalorder %s191, %s194
    %p203 = scmp.eq.s32.totalorder %s19, 1
    %p204 = por %p202, %p203
    %p205 = scmp.ne.s32.totalorder %s194, %s195
    %p206 = scmp.eq.s32.totalorder %s19, 0
    %p207 = por %p205, %p206
    %p208 = scmp.ne.s32.totalorder %s194, %s195
    %p209 = scmp.eq.s32.totalorder %s20, 1
    %p210 = por %p208, %p209
    %p212 = scmp.ne.s32.totalorder %s195, %s211
    %p213 = scmp.eq.s32.totalorder %s20, 0
    %p214 = por %p212, %p213
    %s215 = ssub.s32 %s21, %s33
    %p216 = scmp.eq.s32.totalorder %s215, 0
    %s218 = sadd.s32 %s217, 1
    %s219 = scalar_select %p216, %s217, %s218
    %p222 = pneg %p216
    %p223 = scmp.eq.s32.totalorder %s14, 1
    %p224 = por %p222, %p223
    %p225 = scmp.ne.s32.totalorder %s217, %s220
    %p226 = scmp.eq.s32.totalorder %s14, 0
    %p227 = por %p225, %p226
    %p228 = scmp.ne.s32.totalorder %s217, %s220
    %p229 = scmp.eq.s32.totalorder %s19, 1
    %p230 = por %p228, %p229
    %p231 = scmp.ne.s32.totalorder %s220, %s221
    %p232 = scmp.eq.s32.totalorder %s19, 0
    %p233 = por %p231, %p232
    %p234 = scmp.ne.s32.totalorder %s220, %s221
    %p235 = scmp.eq.s32.totalorder %s20, 1
    %p236 = por %p234, %p235
    %p238 = scmp.ne.s32.totalorder %s221, %s237
    %p239 = scmp.eq.s32.totalorder %s20, 0
    %p240 = por %p238, %p239
    %p241 = scmp.le.s32.totalorder 1, %s14
    %p242 = scmp.lt.s32.totalorder %s14, 3
    %p243 = pnand %p241, %p242
    %p244 = pneg %p243
    // Predicated region
    $region9: #{tpu_custom_call.1} parent=5 // pred_check
      _
    $region10: #{tpu_custom_call.1} parent=5 // pred_check_branch
      %246 = sbr.rel (%p243) target = $region12
    $region11: #{tpu_custom_call.1} parent=5 // pred_region
      %s247 = ssub.s32 %s14, 1
      // Predicated region
      $region13: #{tpu_custom_call.1} parent=11 // pred_check
        %p248 = pneg %p103
      $region14: #{tpu_custom_call.1} parent=11 // pred_check_branch
        %250 = sbr.rel (%p248) target = $region16
      $region15: #{tpu_custom_call.1} parent=11 // pred_region
        _
      $region16: #{tpu_custom_call.1} parent=11 // pred_fallthru
        _
    $region12: #{tpu_custom_call.1} parent=5 // pred_fallthru
      _
    %p251 = scmp.lt.s32.totalorder %s14, 2
    // Predicated region
    $region17: #{tpu_custom_call.1} parent=5 // pred_check
      %p252 = pneg %p251
    $region18: #{tpu_custom_call.1} parent=5 // pred_check_branch
      %254 = sbr.rel (%p252) target = $region20
    $region19: #{tpu_custom_call.1} parent=5 // pred_region
      // Predicated region
      $region21: #{tpu_custom_call.1} parent=19 // pred_check
        %p255 = pneg %p48
      $region22: #{tpu_custom_call.1} parent=19 // pred_check_branch
        %257 = sbr.rel (%p255) target = $region24
      $region23: #{tpu_custom_call.1} parent=19 // pred_region
        %s258 = smul.u32 2, %s22
        %p259 = scmp.lt.s32.totalorder %s21, 1
        %s260 = scalar_select %p259, %s21, 1
        %p261 = scmp.lt.s32.totalorder %s258, 1
        %s262 = scalar_select %p261, %s258, 1
        %s263 = smul.addr %s260, 2
        %s264 = sadd.s32 %s262, %s263
        %s265 = smul.addr %s264, 8
        %s266 = scalar_lea.vmem %s0, %s265
        %s267 = smul.u32 2, %s22
      $region24: #{tpu_custom_call.1} parent=19 // pred_fallthru
        _
      // Predicated region
      $region25: #{tpu_custom_call.1} parent=19 // pred_check
        %p268 = pneg %p76
      $region26: #{tpu_custom_call.1} parent=19 // pred_check_branch
        %270 = sbr.rel (%p268) target = $region28
      $region27: #{tpu_custom_call.1} parent=19 // pred_region
        %s271 = smul.u32 2, %s22
        %p272 = scmp.lt.s32.totalorder %s21, 1
        %s273 = scalar_select %p272, %s21, 1
        %p274 = scmp.lt.s32.totalorder %s271, 1
        %s275 = scalar_select %p274, %s271, 1
        %s276 = smul.addr %s273, 2
        %s277 = sadd.s32 %s275, %s276
        %s278 = scalar_lea.vmem %s1, %s277
        %s279 = smul.u32 2, %s22
      $region28: #{tpu_custom_call.1} parent=19 // pred_fallthru
        _
    $region20: #{tpu_custom_call.1} parent=5 // pred_fallthru
      _
    %p280 = scmp.le.s32.totalorder 1, %s14
    %p281 = scmp.lt.s32.totalorder %s14, 3
    %p282 = pnand %p280, %p281
    %p283 = pneg %p282
    // Predicated region
    $region29: #{tpu_custom_call.1} parent=5 // pred_check
      _
    $region30: #{tpu_custom_call.1} parent=5 // pred_check_branch
      %285 = sbr.rel (%p282) target = $region32
    $region31: #{tpu_custom_call.1} parent=5 // pred_region
      %s286 = ssub.s32 %s14, 1
      %s287 = smul.u32 2, %s24
      %p288 = scmp.lt.s32.totalorder %s23, 1
      %s289 = scalar_select %p288, %s23, 1
      %p290 = scmp.lt.s32.totalorder %s287, 1
      %s291 = scalar_select %p290, %s287, 1
      %s292 = smul.addr %s289, 2
      %s293 = sadd.s32 %s291, %s292
      %s294 = smul.addr %s293, 8
      %s295 = scalar_lea.vmem %s0, %s294
      %p296 = pneg %p54
      %p297 = pneg %p51
      %s298 = smul.u32 2, %s24
      %p299 = scmp.lt.s32.totalorder %s23, 1
      %s300 = scalar_select %p299, %s23, 1
      %p301 = scmp.lt.s32.totalorder %s298, 1
      %s302 = scalar_select %p301, %s298, 1
      %s303 = smul.addr %s300, 2
      %s304 = sadd.s32 %s302, %s303
      %s305 = scalar_lea.vmem %s1, %s304
      %p306 = pneg %p82
      %p307 = pneg %p79
      %p308 = pneg %p103
      %p309 = pneg %p100
      %p310 = pneg %p129
      %p311 = pneg %p126
      %p312 = scmp.lt.s32.totalorder %s23, 1
      %s313 = scalar_select %p312, %s23, 1
      %s314 = scalar_lea.vmem %s3, %s313
      %p315 = pneg %p155
      %p316 = pneg %p152
      %p317 = scmp.lt.s32.totalorder %s23, 1
      %s318 = scalar_select %p317, %s23, 1
      %s319 = scalar_lea.vmem %s4, %s318
      %p320 = pneg %p181
      %p321 = pneg %p178
      %p322 = scmp.lt.s32.totalorder %s23, 1
      %s323 = scalar_select %p322, %s23, 1
      %s324 = scalar_lea.vmem %s5, %s323
      %p325 = pneg %p207
      %p326 = pneg %p204
      %p327 = scmp.lt.s32.totalorder %s23, 1
      %s328 = scalar_select %p327, %s23, 1
      %s329 = scalar_lea.vmem %s6, %s328
      %p330 = pneg %p233
      %p331 = pneg %p230
      %p332 = scmp.lt.s32.totalorder %s23, 1
      %s333 = scalar_select %p332, %s23, 1
      %s334 = scalar_lea.vmem %s7, %s333
      %s335 = smul.u32 2, %s24
      %p336 = scmp.lt.s32.totalorder %s23, 1
      %s337 = scalar_select %p336, %s23, 1
      %p338 = scmp.lt.s32.totalorder %s335, 1
      %s339 = scalar_select %p338, %s335, 1
      %s340 = smul.addr %s337, 2
      %s341 = sadd.s32 %s339, %s340
      %s342 = smul.addr %s341, 8
      %s343 = scalar_lea.vmem %s0, %s342
      %s344 = smul.u32 2, %s24
      %s345 = smul.u32 2, %s24
      %p346 = scmp.lt.s32.totalorder %s23, 1
      %s347 = scalar_select %p346, %s23, 1
      %p348 = scmp.lt.s32.totalorder %s345, 1
      %s349 = scalar_select %p348, %s345, 1
      %s350 = smul.addr %s347, 2
      %s351 = sadd.s32 %s349, %s350
      %s352 = scalar_lea.vmem %s1, %s351
      %s353 = smul.u32 2, %s24
      %p354 = scmp.lt.s32.totalorder %s23, 1
      %s355 = scalar_select %p354, %s23, 1
      %s356 = scalar_lea.vmem %s3, %s355
      %p357 = scmp.lt.s32.totalorder %s23, 1
      %s358 = scalar_select %p357, %s23, 1
      %s359 = scalar_lea.vmem %s4, %s358
      %p360 = scmp.lt.s32.totalorder %s23, 1
      %s361 = scalar_select %p360, %s23, 1
      %s362 = scalar_lea.vmem %s5, %s361
      %p363 = scmp.lt.s32.totalorder %s23, 1
      %s364 = scalar_select %p363, %s23, 1
      %s365 = scalar_lea.vmem %s6, %s364
      %p366 = scmp.lt.s32.totalorder %s23, 1
      %s367 = scalar_select %p366, %s23, 1
      %s368 = scalar_lea.vmem %s7, %s367
      %p369 = scmp.eq.s32.totalorder %s24, 0
      // Predicated region
      $region33: #{tpu_custom_call.1} parent=31 // pred_check
        %p370 = pneg %p369
      $region34: #{tpu_custom_call.1} parent=31 // pred_check_branch
        %372 = sbr.rel (%p370) target = $region36
      $region35: #{tpu_custom_call.1} parent=31 // pred_region
        %vm373 = vcmask 0
        %374 = vst.msk [vmem:[%s356] sm:$0x1] %vm373, 0.0
        %375 = vst.msk [vmem:[%s359] sm:$0x1] %vm373, 0.0
        %376 = vst.msk [vmem:[%s362] sm:$0x1] %vm373, 0.0
        %377 = vst.msk [vmem:[%s365] sm:$0x1] %vm373, 0.0
        %378 = vst.msk [vmem:[%s368] sm:$0x1] %vm373, 0.0
      $region36: #{tpu_custom_call.1} parent=31 // pred_fallthru
        _
      %v379 = vld [vmem:[%s343] sm:$0x3f]
      %v380 = vld [vmem:[%s343 + $0x8] sm:$0x3f]
      %v381 = vld [vmem:[%s352] sm:$0x3]
      %v382 = vld [vmem:[%s2] sm:$0x3f]
      %v383 = vlaneseq
      %v384 = vshrl.u32 %v383, 7
      %v385 = vlaneseq
      %v386 = vshrl.u32 %v385, 7
      %v387 = vsub.s32 0, %v386
      %v388 = vrot.slane %v381, %v387
      %v389 = vlaneseq
      %v390 = vshrl.u32 %v389, 7
      %v391 = vsub.s32 1, %v390
      %v392 = vrot.slane %v381, %v391
      %vm393 = vcmp.eq.s32.totalorder %v384, %v388
      %vm394 = vcmp.eq.s32.totalorder %v384, %v392
      %v395 = vsel %vm393, 1, 0
      %v396 = vsel %vm394, 1, 0
      %v397 = vcvt.s32.f32 %v395
      %v398 = vcvt.s32.f32 %v396
      %vm399 = vcmask 1045504
      %v400 = vsel %vm399, %v379, -inf
      %v401 = vrot.slane %v400, 4
      %v402 = vmax.f32 %v400, %v401
      %v403 = vrot.slane %v402, 2
      %v404 = vmax.f32 %v402, %v403
      %v405 = vrot.slane %v404, 1
      %v406 = vmax.f32 %v404, %v405
      %v407 = vsel %vm399, %v380, -inf
      %v408 = vrot.slane %v407, 4
      %v409 = vmax.f32 %v407, %v408
      %v410 = vrot.slane %v409, 2
      %v411 = vmax.f32 %v409, %v410
      %v412 = vrot.slane %v411, 1
      %v413 = vmax.f32 %v411, %v412
      %v414 = vsub.f32 %v379, %v406
      %v415 = vsub.f32 %v380, %v413
      %v416 = vmul.f32 %v414, 1.442695
      %v417 = vpow.pop %v416
      %v418 = vmul.f32 %v415, 1.442695
      %v419 = vpow.pop %v418
      %v420 = vsel %vm399, %v417, 0.0
      %v421 = vrot.slane %v420, 4
      %v422 = vadd.f32 %v420, %v421
      %v423 = vrot.slane %v422, 2
      %v424 = vadd.f32 %v422, %v423
      %v425 = vrot.slane %v424, 1
      %v426 = vadd.f32 %v424, %v425
      %v427 = vsel %vm399, %v419, 0.0
      %v428 = vrot.slane %v427, 4
      %v429 = vadd.f32 %v427, %v428
      %v430 = vrot.slane %v429, 2
      %v431 = vadd.f32 %v429, %v430
      %v432 = vrot.slane %v431, 1
      %v433 = vadd.f32 %v431, %v432
      %v434 = vlog2.pop %v426
      %v435 = vmul.f32 %v434, 0.6931472
      %v436 = vlog2.pop %v433
      %v437 = vmul.f32 %v436, 0.6931472
      %v438 = vmul.f32 %v414, %v397
      %v439 = vmul.f32 %v415, %v398
      %v440 = vsel %vm399, %v438, 0.0
      %v441 = vrot.slane %v440, 4
      %v442 = vadd.f32 %v440, %v441
      %v443 = vrot.slane %v442, 2
      %v444 = vadd.f32 %v442, %v443
      %v445 = vrot.slane %v444, 1
      %v446 = vadd.f32 %v444, %v445
      %v447 = vsel %vm399, %v439, 0.0
      %v448 = vrot.slane %v447, 4
      %v449 = vadd.f32 %v447, %v448
      %v450 = vrot.slane %v449, 2
      %v451 = vadd.f32 %v449, %v450
      %v452 = vrot.slane %v451, 1
      %v453 = vadd.f32 %v451, %v452
      %v454 = vsel %vm399, %v397, 0.0
      %v455 = vrot.slane %v454, 4
      %v456 = vadd.f32 %v454, %v455
      %v457 = vrot.slane %v456, 2
      %v458 = vadd.f32 %v456, %v457
      %v459 = vrot.slane %v458, 1
      %v460 = vadd.f32 %v458, %v459
      %v461 = vsel %vm399, %v398, 0.0
      %v462 = vrot.slane %v461, 4
      %v463 = vadd.f32 %v461, %v462
      %v464 = vrot.slane %v463, 2
      %v465 = vadd.f32 %v463, %v464
      %v466 = vrot.slane %v465, 1
      %v467 = vadd.f32 %v465, %v466
      %469 = vset.pattern.permute.xlu0 0
      %470 = vperm.xlu0 %469, %v382
      %v471 = vpop.permute.xlu0 %470
      %v473 = vmul.f32 %v471, %v397
      %v474 = vmul.f32 %v471, %v398
      %v475 = vsel %vm399, %v473, 0.0
      %v476 = vrot.slane %v475, 4
      %v477 = vadd.f32 %v475, %v476
      %v478 = vrot.slane %v477, 2
      %v479 = vadd.f32 %v477, %v478
      %v480 = vrot.slane %v479, 1
      %v481 = vadd.f32 %v479, %v480
      %v482 = vsel %vm399, %v474, 0.0
      %v483 = vrot.slane %v482, 4
      %v484 = vadd.f32 %v482, %v483
      %v485 = vrot.slane %v484, 2
      %v486 = vadd.f32 %v484, %v485
      %v487 = vrot.slane %v486, 1
      %v488 = vadd.f32 %v486, %v487
      %v489 = vsub.f32 %v435, %v446
      %v490 = vsub.f32 %v437, %v453
      %v491 = vmul.f32 %v489, %v460
      %v492 = vmul.f32 %v490, %v467
      %v493 = vsub.f32 0.0, %v491
      %v494 = vsub.f32 0.0, %v492
      %v495 = vmul.f32 %v493, 1.442695
      %v496 = vpow.pop %v495
      %v497 = vmul.f32 %v494, 1.442695
      %v498 = vpow.pop %v497
      %v499 = vsub.f32 1.0, %v496
      %v500 = vsub.f32 1.0, %v498
      %v501 = vmul.f32 %v499, %v499
      %v502 = vmul.f32 %v500, %v500
      %v503 = vmul.f32 %v501, %v491
      %v504 = vmul.f32 %v502, %v492
      %vm505 = vcmp.ne.s32.totalorder %v381, 255
      %v506 = vsel %vm505, 1, 0
      %v507 = vcvt.s32.f32 %v506
      %v508 = vld [vmem:[%s356] sm:$0x1]
      %v511 = vcombine.low %v481, %v488
      %v513 = vunpack.c.l.s4 1966171168
      %v514 = vunpack.c.0.s8 %v513
      %v515 = vlaneseq
      %v516 = vshrl.u32 %v515, 7
      %v517 = vsub.s32 %v514, %v516
      %v518 = vrot.slane %v511, %v517
      %v520 = vunpack.c.l.s4 1966171168
      %v521 = vunpack.c.0.s8 %v520
      %v522 = vlaneseq
      %v523 = vshrl.u32 %v522, 7
      %v524 = vsub.s32 %v521, %v523
      %v525 = vrot.slane %v518, %v524
      %v527 = vmul.f32 %v507, %v525
      %v530 = vcombine.low %v491, %v492
      %v532 = vunpack.c.l.s4 1966171168
      %v533 = vunpack.c.0.s8 %v532
      %v534 = vlaneseq
      %v535 = vshrl.u32 %v534, 7
      %v536 = vsub.s32 %v533, %v535
      %v537 = vrot.slane %v530, %v536
      %v539 = vunpack.c.l.s4 1966171168
      %v540 = vunpack.c.0.s8 %v539
      %v541 = vlaneseq
      %v542 = vshrl.u32 %v541, 7
      %v543 = vsub.s32 %v540, %v542
      %v544 = vrot.slane %v537, %v543
      %v546 = vmul.f32 %v527, %v544
      %v548 = vlaneseq
      %v549 = vshrl.u32 %v548, 7
      %v550 = vsub.s32 0, %v549
      %v551 = vrot.slane %v546, %v550
      %v552 = vlaneseq
      %v553 = vshrl.u32 %v552, 7
      %v554 = vsub.s32 1, %v553
      %v555 = vrot.slane %v546, %v554
      %vm558 = vcmask 1040384
      %v559 = vsel %vm558, %v551, 0.0
      %v560 = vsel %vm558, %v555, 0.0
      %v561 = vadd.f32 %v559, %v560
      %562 = vadd.xlane.f32.xlu0 %v561
      %v563 = vpop.xlane.xlu0 %562
      %v564 = vadd.f32 %v508, %v563
      %vm565 = vcmask 0
      %566 = vst.msk [vmem:[%s356] sm:$0x1] %vm565, %v564
      %v567 = vld [vmem:[%s359] sm:$0x1]
      %v569 = vlaneseq
      %v570 = vshrl.u32 %v569, 7
      %v571 = vsub.s32 0, %v570
      %v572 = vrot.slane %v527, %v571
      %v573 = vlaneseq
      %v574 = vshrl.u32 %v573, 7
      %v575 = vsub.s32 1, %v574
      %v576 = vrot.slane %v527, %v575
      %v579 = vsel %vm558, %v572, 0.0
      %v580 = vsel %vm558, %v576, 0.0
      %v581 = vadd.f32 %v579, %v580
      %582 = vadd.xlane.f32.xlu0 %v581
      %v583 = vpop.xlane.xlu0 %582
      %v584 = vadd.f32 %v567, %v583
      %585 = vst.msk [vmem:[%s359] sm:$0x1] %vm565, %v584
      %v586 = vld [vmem:[%s362] sm:$0x1]
      %v587 = vmul.f32 %v496, %v460
      %v588 = vmul.f32 %v498, %v467
      %v589 = vadd.f32 %v587, %v588
      %590 = vadd.xlane.f32.xlu0 %v589
      %v591 = vpop.xlane.xlu0 %590
      %v592 = vadd.f32 %v586, %v591
      %593 = vst.msk [vmem:[%s362] sm:$0x1] %vm565, %v592
      %v594 = vld [vmem:[%s365] sm:$0x1]
      %v595 = vadd.f32 %v460, %v467
      %596 = vadd.xlane.f32.xlu0 %v595
      %v597 = vpop.xlane.xlu0 %596
      %v598 = vadd.f32 %v594, %v597
      %599 = vst.msk [vmem:[%s365] sm:$0x1] %vm565, %v598
      %v600 = vld [vmem:[%s368] sm:$0x1]
      %v601 = vadd.f32 %v503, %v504
      %602 = vadd.xlane.f32.xlu0 %v601
      %v603 = vpop.xlane.xlu0 %602
      %v604 = vadd.f32 %v600, %v603
      %605 = vst.msk [vmem:[%s368] sm:$0x1] %vm565, %v604
      %p606 = scmp.lt.s32.totalorder %s23, 1
      %s607 = scalar_select %p606, %s23, 1
      %s608 = scalar_lea.vmem %s3, %s607
      %p609 = scmp.lt.s32.totalorder %s23, 1
      %s610 = scalar_select %p609, %s23, 1
      %s611 = scalar_lea.vmem %s4, %s610
      %p612 = scmp.lt.s32.totalorder %s23, 1
      %s613 = scalar_select %p612, %s23, 1
      %s614 = scalar_lea.vmem %s5, %s613
      %p615 = scmp.lt.s32.totalorder %s23, 1
      %s616 = scalar_select %p615, %s23, 1
      %s617 = scalar_lea.vmem %s6, %s616
      %p618 = scmp.lt.s32.totalorder %s23, 1
      %s619 = scalar_select %p618, %s23, 1
      %s620 = scalar_lea.vmem %s7, %s619
      // Predicated region
      $region37: #{tpu_custom_call.1} parent=31 // pred_check
        %p621 = pneg %p126
      $region38: #{tpu_custom_call.1} parent=31 // pred_check_branch
        %623 = sbr.rel (%p621) target = $region40
      $region39: #{tpu_custom_call.1} parent=31 // pred_region
        _
      $region40: #{tpu_custom_call.1} parent=31 // pred_fallthru
        _
      // Predicated region
      $region41: #{tpu_custom_call.1} parent=31 // pred_check
        %p624 = pneg %p152
      $region42: #{tpu_custom_call.1} parent=31 // pred_check_branch
        %626 = sbr.rel (%p624) target = $region44
      $region43: #{tpu_custom_call.1} parent=31 // pred_region
        _
      $region44: #{tpu_custom_call.1} parent=31 // pred_fallthru
        _
      // Predicated region
      $region45: #{tpu_custom_call.1} parent=31 // pred_check
        %p627 = pneg %p178
      $region46: #{tpu_custom_call.1} parent=31 // pred_check_branch
        %629 = sbr.rel (%p627) target = $region48
      $region47: #{tpu_custom_call.1} parent=31 // pred_region
        _
      $region48: #{tpu_custom_call.1} parent=31 // pred_fallthru
        _
      // Predicated region
      $region49: #{tpu_custom_call.1} parent=31 // pred_check
        %p630 = pneg %p204
      $region50: #{tpu_custom_call.1} parent=31 // pred_check_branch
        %632 = sbr.rel (%p630) target = $region52
      $region51: #{tpu_custom_call.1} parent=31 // pred_region
        _
      $region52: #{tpu_custom_call.1} parent=31 // pred_fallthru
        _
      // Predicated region
      $region53: #{tpu_custom_call.1} parent=31 // pred_check
        %p633 = pneg %p230
      $region54: #{tpu_custom_call.1} parent=31 // pred_check_branch
        %635 = sbr.rel (%p633) target = $region56
      $region55: #{tpu_custom_call.1} parent=31 // pred_region
        _
      $region56: #{tpu_custom_call.1} parent=31 // pred_fallthru
        _
    $region32: #{tpu_custom_call.1} parent=5 // pred_fallthru
      _
    %p636 = scmp.le.s32.totalorder 2, %s14
    // Predicated region
    $region57: #{tpu_custom_call.1} parent=5 // pred_check
      %p637 = pneg %p636
    $region58: #{tpu_custom_call.1} parent=5 // pred_check_branch
      %639 = sbr.rel (%p637) target = $region60
    $region59: #{tpu_custom_call.1} parent=5 // pred_region
      %s640 = ssub.s32 %s14, 2
      // Predicated region
      $region61: #{tpu_custom_call.1} parent=59 // pred_check
        %p641 = pneg %p132
      $region62: #{tpu_custom_call.1} parent=59 // pred_check_branch
        %643 = sbr.rel (%p641) target = $region64
      $region63: #{tpu_custom_call.1} parent=59 // pred_region
        %p644 = scmp.lt.s32.totalorder %s25, 1
        %s645 = scalar_select %p644, %s25, 1
        %s646 = scalar_lea.vmem %s3, %s645
      $region64: #{tpu_custom_call.1} parent=59 // pred_fallthru
        _
      // Predicated region
      $region65: #{tpu_custom_call.1} parent=59 // pred_check
        %p647 = pneg %p158
      $region66: #{tpu_custom_call.1} parent=59 // pred_check_branch
        %649 = sbr.rel (%p647) target = $region68
      $region67: #{tpu_custom_call.1} parent=59 // pred_region
        %p650 = scmp.lt.s32.totalorder %s25, 1
        %s651 = scalar_select %p650, %s25, 1
        %s652 = scalar_lea.vmem %s4, %s651
      $region68: #{tpu_custom_call.1} parent=59 // pred_fallthru
        _
      // Predicated region
      $region69: #{tpu_custom_call.1} parent=59 // pred_check
        %p653 = pneg %p184
      $region70: #{tpu_custom_call.1} parent=59 // pred_check_branch
        %655 = sbr.rel (%p653) target = $region72
      $region71: #{tpu_custom_call.1} parent=59 // pred_region
        %p656 = scmp.lt.s32.totalorder %s25, 1
        %s657 = scalar_select %p656, %s25, 1
        %s658 = scalar_lea.vmem %s5, %s657
      $region72: #{tpu_custom_call.1} parent=59 // pred_fallthru
        _
      // Predicated region
      $region73: #{tpu_custom_call.1} parent=59 // pred_check
        %p659 = pneg %p210
      $region74: #{tpu_custom_call.1} parent=59 // pred_check_branch
        %661 = sbr.rel (%p659) target = $region76
      $region75: #{tpu_custom_call.1} parent=59 // pred_region
        %p662 = scmp.lt.s32.totalorder %s25, 1
        %s663 = scalar_select %p662, %s25, 1
        %s664 = scalar_lea.vmem %s6, %s663
      $region76: #{tpu_custom_call.1} parent=59 // pred_fallthru
        _
      // Predicated region
      $region77: #{tpu_custom_call.1} parent=59 // pred_check
        %p665 = pneg %p236
      $region78: #{tpu_custom_call.1} parent=59 // pred_check_branch
        %667 = sbr.rel (%p665) target = $region80
      $region79: #{tpu_custom_call.1} parent=59 // pred_region
        %p668 = scmp.lt.s32.totalorder %s25, 1
        %s669 = scalar_select %p668, %s25, 1
        %s670 = scalar_lea.vmem %s7, %s669
      $region80: #{tpu_custom_call.1} parent=59 // pred_fallthru
        _
    $region60: #{tpu_custom_call.1} parent=5 // pred_fallthru
      _
  $region6: #{tpu_custom_call.1} parent=0 // loop_footer
    %s18 = sadd.s32 1, %s14
  $region7: #{tpu_custom_call.1} parent=0 // loop_footer_branch
    %13 = sbr.rel target = $region3
  $region8: #{tpu_custom_call.1} parent=0 // loop_exit
    _

</llo_original>
